<compile_context>
chip_gen: v6e
topology: v6e:2x2x1
jax: 0.10.0
libtpu: 0.0.40
codegen_flags: <defaults>
</compile_context>

<pallas_src>
import functools

import numpy as np
import jax
import jax.numpy as jnp
from jax.experimental import pallas as pl
from jax.experimental.pallas import tpu as pltpu


# ----------------------------------------------------------------------------
# helpers
# ----------------------------------------------------------------------------
def _round_up(x, m):
    return (x + m - 1) // m * m


def _pick_col_tile(h_pad, target=1024):
    # h_pad is a multiple of 128, so this always terminates with tn >= 128.
    tn = min(target, h_pad)
    while h_pad % tn:
        tn -= 128
    return tn


def _pick_row_tile(b_pad, sub, target=256):
    tm = min(target, b_pad)
    tm -= tm % sub
    tm = max(tm, sub)
    while b_pad % tm:
        tm -= sub
    return tm


def _vmem_limit(nbytes):
    # Generation-aware scoped-VMEM limit: ~85% of physical VMEM
    # (v5e/v6e: 128 MiB -> ~108 MiB, v7x: 64 MiB -> ~54 MiB).
    try:
        cap = int(pltpu.get_tpu_info().vmem_capacity_bytes)
    except Exception:
        cap = 64 << 20
    cap = int(cap * 0.85)
    return int(min(max(nbytes + (4 << 20), 16 << 20), cap))


def _apply_activation(pre, activation):
    if activation == "tanh":
        return jnp.tanh(pre)
    if activation == "relu":
        return jnp.maximum(pre, 0.0)
    if activation == "identity":
        return pre
    # TODO(synk): 'self_norm' activation has no clean elementwise Pallas
    # equivalent here; only tanh/relu/identity are implemented.
    raise ValueError(f"unsupported activation: {activation}")


# ----------------------------------------------------------------------------
# Kernels
# ----------------------------------------------------------------------------
def _reservoir_step_kernel(x_ref, h_ref, wih_ref, whh_ref, b_ref, out_ref,
                           *, alpha, activation):
    # Two MXU dots (input + recurrent projections) with f32 accumulation.
    pre = jnp.dot(x_ref[...], wih_ref[...], preferred_element_type=jnp.float32)
    pre = pre + jnp.dot(h_ref[...].astype(whh_ref.dtype), whh_ref[...],
                        preferred_element_type=jnp.float32)
    pre = pre + b_ref[...]                         # (1, tn) broadcasts over batch
    h = h_ref[...]                                 # f32
    h_new = _apply_activation(pre, activation)     # f32 EUP path (v5e-safe)
    out_ref[...] = (h + alpha * (h_new - h)).astype(out_ref.dtype)


def _reservoir_rollout_kernel(u_ref, h0_ref, whh_ref, out_ref, h_state,
                              *, alpha, ts, activation):
    @pl.when(pl.program_id(0) == 0)
    def _():
        h_state[...] = h0_ref[...]

    # TS recurrence steps per grid iteration; statically unrolled so the LLO
    # scheduler can overlap step t's EUP tanh with issuing step t+1's MXU work.
    for s in range(ts):
        h = h_state[...]
        pre = jnp.dot(h.astype(whh_ref.dtype), whh_ref[...],
                      preferred_element_type=jnp.float32) + u_ref[s]
        h_next = h + alpha * (_apply_activation(pre, activation) - h)
        h_state[...] = h_next                      # state stays resident in VMEM
        out_ref[s] = h_next.astype(out_ref.dtype)


# ----------------------------------------------------------------------------
# One-time parameter prep (hoisted out of the per-call path)
# ----------------------------------------------------------------------------
def prepare_reservoir_params(w_ih, w_hh, b_ih, *, compute_dtype=jnp.bfloat16):
    """Transpose + pad the weights once.

    w_ih : (H, I), w_hh : (H, H), b_ih : (H,) or None  (PyTorch F.linear layout)
    Only the MXU operands are cast to `compute_dtype` (default bf16: the single
    step is weight-streaming-bound, so bf16 halves HBM bytes); bias / activation
    / leaky blend stay f32.  For very long rollouts prefer compute_dtype=f32 to
    avoid bf16 drift of the recurrent term.
    """
    H, I = w_ih.shape
    I_pad = _round_up(I, 128)
    H_pad = _round_up(H, 128)
    w_ih_t = jnp.zeros((I_pad, H_pad), jnp.float32).at[:I, :H].set(jnp.transpose(w_ih))
    w_hh_t = jnp.zeros((H_pad, H_pad), jnp.float32).at[:H, :H].set(jnp.transpose(w_hh))
    bias = jnp.zeros((1, H_pad), jnp.float32)
    if b_ih is not None:
        bias = bias.at[0, :H].set(b_ih)
    cdt = jnp.dtype(compute_dtype)
    return dict(w_ih_t=w_ih_t.astype(cdt), w_hh_t=w_hh_t.astype(cdt), bias=bias,
                I=int(I), H=int(H), I_pad=int(I_pad), H_pad=int(H_pad),
                compute_dtype=cdt)


# ----------------------------------------------------------------------------
# Single-step forward (matches ReservoirLayer.forward)
# ----------------------------------------------------------------------------
def reservoir_forward(x, h, params, alpha, *, activation="tanh",
                      row_tile=256, col_tile=1024):
    B, I = x.shape
    H = h.shape[1]
    assert I == params["I"] and H == params["H"]
    I_pad, H_pad = params["I_pad"], params["H_pad"]
    cdt = params["compute_dtype"]
    sub = 16 if cdt == jnp.bfloat16 else 8          # bf16 operand -> (16,128) tile
    B_pad = _round_up(B, sub)

    # TODO(synk): for repeated stepping, keep x/h pre-padded across calls to
    # avoid these per-call padded HBM copies (or use reservoir_rollout).
    x_pad = jnp.zeros((B_pad, I_pad), cdt).at[:B, :I].set(x.astype(cdt))
    h_pad = jnp.zeros((B_pad, H_pad), jnp.float32).at[:B, :H].set(
        h.astype(jnp.float32))

    tn = _pick_col_tile(H_pad, col_tile)
    tm = _pick_row_tile(B_pad, sub, row_tile)

    itc = cdt.itemsize
    vmem = (2 * tm * I_pad * itc + 2 * tm * H_pad * 4      # x, h row blocks
            + 2 * I_pad * tn * itc + 2 * H_pad * tn * itc  # weight column tiles
            + 2 * 8 * tn * 4 + 2 * tm * tn * 4)            # bias, out

    kernel = functools.partial(_reservoir_step_kernel, alpha=float(alpha),
                               activation=activation)
    out_pad = pl.pallas_call(
        kernel,
        out_shape=jax.ShapeDtypeStruct((B_pad, H_pad), jnp.float32),
        grid=(B_pad // tm, H_pad // tn),
        in_specs=[
            pl.BlockSpec((tm, I_pad), lambda i, j: (i, 0)),    # x row tile
            pl.BlockSpec((tm, H_pad), lambda i, j: (i, 0)),    # h row tile (f32)
            pl.BlockSpec((I_pad, tn), lambda i, j: (0, j)),    # W_ih^T column tile
            pl.BlockSpec((H_pad, tn), lambda i, j: (0, j)),    # W_hh^T column tile
            pl.BlockSpec((1, tn), lambda i, j: (0, j)),        # bias column tile
        ],
        out_specs=pl.BlockSpec((tm, tn), lambda i, j: (i, j)),
        compiler_params=pltpu.CompilerParams(
            dimension_semantics=("parallel", "parallel"),      # both TCs on v7x
            vmem_limit_bytes=_vmem_limit(vmem)),
    )(x_pad, h_pad, params["w_ih_t"], params["w_hh_t"], params["bias"])
    return out_pad[:B, :H]


# ----------------------------------------------------------------------------
# T-step rollout: input projection hoisted; W_hh^T resident; h in VMEM scratch
# ----------------------------------------------------------------------------
def reservoir_rollout(x_seq, h0, params, alpha, *, activation="tanh",
                      steps_per_block=4):
    """Applies the reservoir step T times; returns all states (T, B, H)."""
    T, B, I = x_seq.shape
    H = h0.shape[1]
    assert I == params["I"] and H == params["H"]
    I_pad, H_pad = params["I_pad"], params["H_pad"]
    cdt = params["compute_dtype"]
    sub = 16 if cdt == jnp.bfloat16 else 8
    B_pad = _round_up(B, sub)
    TS = min(int(steps_per_block), T)
    T_pad = _round_up(T, TS)

    # Hoist the non-recurrent input projection off the serial path: one large
    # batched matmul over all T*B rows at full MXU utilisation (plain XLA).
    x_pad = jnp.zeros((T_pad, B_pad, I_pad), cdt).at[:T, :B, :I].set(
        x_seq.astype(cdt))
    u = jnp.einsum("tbi,ih->tbh", x_pad, params["w_ih_t"],
                   preferred_element_type=jnp.float32) + params["bias"]

    h0_pad = jnp.zeros((B_pad, H_pad), jnp.float32).at[:B, :H].set(
        h0.astype(jnp.float32))

    itc = cdt.itemsize
    vmem = (2 * TS * B_pad * H_pad * 4          # u blocks (double-buffered)
            + 2 * TS * B_pad * H_pad * 4        # out blocks
            + B_pad * H_pad * 4                 # h0 (single-buffered)
            + H_pad * H_pad * itc               # resident W_hh^T (single-buffered)
            + B_pad * H_pad * 4)                # h_state scratch

    kernel = functools.partial(_reservoir_rollout_kernel, alpha=float(alpha),
                               ts=TS, activation=activation)

    def _resident_spec(shape, pm):
        if pm is None:
            return pl.BlockSpec(shape, lambda t: (0,) * len(shape))
        return pl.BlockSpec(shape, lambda t: (0,) * len(shape), pipeline_mode=pm)

    # TODO(synk): for very large H the resident f32/bf16 W_hh^T overflows v7x's
    # 64 MiB VMEM (~2k/4k hidden); that case needs an inner column-tile grid
    # axis with two h-state scratch buffers (read h_cur / write h_next, swap).
    def _call(pm):
        return pl.pallas_call(
            kernel,
            out_shape=jax.ShapeDtypeStruct((T_pad, B_pad, H_pad), jnp.float32),
            grid=(T_pad // TS,),
            in_specs=[
                pl.BlockSpec((TS, B_pad, H_pad), lambda t: (t, 0, 0)),  # U_t stream
                _resident_spec((B_pad, H_pad), pm),                     # h0
                _resident_spec((H_pad, H_pad), pm),                     # W_hh^T
            ],
            out_specs=pl.BlockSpec((TS, B_pad, H_pad), lambda t: (t, 0, 0)),
            scratch_shapes=[pltpu.VMEM((B_pad, H_pad), jnp.float32)],   # recurrent h
            compiler_params=pltpu.CompilerParams(
                dimension_semantics=("arbitrary",),        # recurrence: sequential
                vmem_limit_bytes=_vmem_limit(vmem)),
        )(u, h0_pad, params["w_hh_t"])

    try:
        out = _call(pl.Buffered(1))   # constant index_map -> single buffer (VMEM)
    except Exception:
        out = _call(None)             # fall back to default double buffering
    return out[:T, :B, :H]


# ----------------------------------------------------------------------------
# Deterministic parameter init (mirrors reset_parameters, density = 1.0)
# ----------------------------------------------------------------------------
def init_reservoir_params(key, input_size, hidden_size, spectral_radius,
                          in_scaling=1.0, bias_scale=1.0):
    k1, k2, k3 = jax.random.split(key, 3)
    w_ih = jax.random.uniform(k1, (hidden_size, input_size),
                              minval=-1.0, maxval=1.0, dtype=jnp.float32) * in_scaling
    b_ih = jax.random.uniform(k2, (hidden_size,),
                              minval=-1.0, maxval=1.0, dtype=jnp.float32) * bias_scale
    w_hh = jax.random.uniform(k3, (hidden_size, hidden_size),
                              minval=-1.0, maxval=1.0, dtype=jnp.float32)
    # Spectral-radius rescale: eigendecomposition has no TPU kernel -> host numpy
    # (init-time glue, not part of the forward hot path).
    abs_eigs = np.abs(np.linalg.eigvals(np.asarray(w_hh)))
    w_hh = w_hh * (spectral_radius / float(np.max(abs_eigs)))
    # TODO(synk): density < 1.0 (random sparsity mask on w_hh) not exercised; density=1 assumed.
    return w_ih, w_hh, b_ih


# ----------------------------------------------------------------------------
# Pure-JAX references
# ----------------------------------------------------------------------------
def reservoir_ref(x, h, w_ih, w_hh, b_ih, alpha):
    h_new = jnp.tanh(x @ w_ih.T + b_ih + h @ w_hh.T)
    return (1.0 - alpha) * h + alpha * h_new


def reservoir_rollout_ref(x_seq, h0, w_ih, w_hh, b_ih, alpha):
    def step(h, x):
        h_next = reservoir_ref(x, h, w_ih, w_hh, b_ih, alpha)
        return h_next, h_next
    _, hs = jax.lax.scan(step, h0, x_seq)
    return hs


if __name__ == "__main__":
    batch, input_size, hidden_size = 4, 16, 32
    spectral_radius, leaking_rate = 0.9, 0.5
    T = 8

    key = jax.random.PRNGKey(0)
    kp, kx, kh, ks = jax.random.split(key, 4)

    w_ih, w_hh, b_ih = init_reservoir_params(
        kp, input_size, hidden_size, spectral_radius,
        in_scaling=1.0, bias_scale=1.0)

    x = jax.random.normal(kx, (batch, input_size), dtype=jnp.float32)
    h = jax.random.normal(kh, (batch, hidden_size), dtype=jnp.float32)
    x_seq = jax.random.normal(ks, (T, batch, input_size), dtype=jnp.float32)

    ref = reservoir_ref(x, h, w_ih, w_hh, b_ih, leaking_rate)

    # --- single step, f32 MXU operands ------------------------------------
    params_f32 = prepare_reservoir_params(w_ih, w_hh, b_ih, compute_dtype=jnp.float32)
    out = jax.block_until_ready(reservoir_forward(x, h, params_f32, leaking_rate))
    np.testing.assert_allclose(np.asarray(out), np.asarray(ref), rtol=1e-4, atol=1e-4)

    # --- single step, bf16 MXU operands (f32 accumulation + elementwise) ---
    params_bf16 = prepare_reservoir_params(w_ih, w_hh, b_ih, compute_dtype=jnp.bfloat16)
    out_bf = jax.block_until_ready(reservoir_forward(x, h, params_bf16, leaking_rate))
    np.testing.assert_allclose(np.asarray(out_bf), np.asarray(ref), rtol=5e-2, atol=5e-2)

    # --- T-step rollout: hoisted input projection + resident W_hh^T --------
    states = jax.block_until_ready(
        reservoir_rollout(x_seq, h, params_f32, leaking_rate, steps_per_block=4))
    states_ref = reservoir_rollout_ref(x_seq, h, w_ih, w_hh, b_ih, leaking_rate)
    np.testing.assert_allclose(np.asarray(states), np.asarray(states_ref),
                               rtol=1e-3, atol=1e-3)

    print("KERNEL_OK")
</pallas_src>

<mosaic_0001>
module attributes {stable_mosaic.version = 11 : i64} {
  func.func @_reservoir_step_kernel(%arg0: i32, %arg1: i32, %arg2: memref<8x128xf32, #tpu.memory_space<vmem>>, %arg3: memref<8x128xf32, #tpu.memory_space<vmem>>, %arg4: memref<128x128xf32, #tpu.memory_space<vmem>>, %arg5: memref<128x128xf32, #tpu.memory_space<vmem>>, %arg6: memref<1x128xf32, #tpu.memory_space<vmem>>, %arg7: memref<8x128xf32, #tpu.memory_space<vmem>>) attributes {dimension_semantics = [#tpu.dimension_semantics<parallel>, #tpu.dimension_semantics<parallel>], iteration_bounds = array<i64: 1, 1>, scalar_prefetch = 0 : i64, scratch_operands = 0 : i64, tpu.core_type = #tpu.core_type<tc>, window_params = [{transform_indices = @transform_0, window_bounds = array<i64: 8, 128>}, {transform_indices = @transform_1, window_bounds = array<i64: 8, 128>}, {transform_indices = @transform_2, window_bounds = array<i64: 128, 128>}, {transform_indices = @transform_3, window_bounds = array<i64: 128, 128>}, {transform_indices = @transform_4, window_bounds = array<i64: 1, 128>}, {transform_indices = @transform_5, window_bounds = array<i64: 8, 128>}]} {
    %c0 = arith.constant 0 : index
    %c0_0 = arith.constant 0 : index
    %0 = vector.load %arg2[%c0, %c0_0] : memref<8x128xf32, #tpu.memory_space<vmem>>, vector<8x128xf32>
    %c0_1 = arith.constant 0 : index
    %c0_2 = arith.constant 0 : index
    %1 = vector.load %arg4[%c0_1, %c0_2] : memref<128x128xf32, #tpu.memory_space<vmem>>, vector<128x128xf32>
    %cst = arith.constant dense<0.000000e+00> : vector<8x128xf32>
    %2 = tpu.matmul %0, %1, %cst {dimension_numbers = #tpu.dot_dimension_numbers<[1], [0], [0], [1], [0, 0, 1, 1], [], []>} : vector<8x128xf32>, vector<128x128xf32>, vector<8x128xf32> -> vector<8x128xf32>
    %c0_3 = arith.constant 0 : index
    %c0_4 = arith.constant 0 : index
    %3 = vector.load %arg3[%c0_3, %c0_4] : memref<8x128xf32, #tpu.memory_space<vmem>>, vector<8x128xf32>
    %c0_5 = arith.constant 0 : index
    %c0_6 = arith.constant 0 : index
    %4 = vector.load %arg5[%c0_5, %c0_6] : memref<128x128xf32, #tpu.memory_space<vmem>>, vector<128x128xf32>
    %cst_7 = arith.constant dense<0.000000e+00> : vector<8x128xf32>
    %5 = tpu.matmul %3, %4, %cst_7 {dimension_numbers = #tpu.dot_dimension_numbers<[1], [0], [0], [1], [0, 0, 1, 1], [], []>} : vector<8x128xf32>, vector<128x128xf32>, vector<8x128xf32> -> vector<8x128xf32>
    %6 = arith.addf %2, %5 : vector<8x128xf32>
    %c0_8 = arith.constant 0 : index
    %c0_9 = arith.constant 0 : index
    %7 = vector.load %arg6[%c0_8, %c0_9] : memref<1x128xf32, #tpu.memory_space<vmem>>, vector<1x128xf32>
    %8 = vector.broadcast %7 : vector<1x128xf32> to vector<8x128xf32>
    %9 = arith.addf %6, %8 : vector<8x128xf32>
    %c0_10 = arith.constant 0 : index
    %c0_11 = arith.constant 0 : index
    %10 = vector.load %arg3[%c0_10, %c0_11] : memref<8x128xf32, #tpu.memory_space<vmem>>, vector<8x128xf32>
    %11 = math.tanh %9 : vector<8x128xf32>
    %12 = arith.subf %11, %10 : vector<8x128xf32>
    %cst_12 = arith.constant 5.000000e-01 : f32
    %13 = vector.broadcast %cst_12 : f32 to vector<8x128xf32>
    %14 = arith.mulf %13, %12 : vector<8x128xf32>
    %15 = arith.addf %10, %14 : vector<8x128xf32>
    %c0_13 = arith.constant 0 : index
    %c0_14 = arith.constant 0 : index
    %16 = vector.load %arg7[%c0_13, %c0_14] : memref<8x128xf32, #tpu.memory_space<vmem>>, vector<8x128xf32>
    tpu.vector_store %arg7[%c0_13, %c0_14], %15 {strides = array<i32>} : memref<8x128xf32, #tpu.memory_space<vmem>>, vector<8x128xf32>,
    return
  }
  func.func @transform_0(%arg0: i32, %arg1: i32) -> (i32, i32) {
    %c0_i32 = arith.constant 0 : i32
    %c0_i32_0 = arith.constant 0 : i32
    return %arg0, %c0_i32 : i32, i32
  }
  func.func @transform_1(%arg0: i32, %arg1: i32) -> (i32, i32) {
    %c0_i32 = arith.constant 0 : i32
    %c0_i32_0 = arith.constant 0 : i32
    return %arg0, %c0_i32 : i32, i32
  }
  func.func @transform_2(%arg0: i32, %arg1: i32) -> (i32, i32) {
    %c0_i32 = arith.constant 0 : i32
    %c0_i32_0 = arith.constant 0 : i32
    return %c0_i32, %arg1 : i32, i32
  }
  func.func @transform_3(%arg0: i32, %arg1: i32) -> (i32, i32) {
    %c0_i32 = arith.constant 0 : i32
    %c0_i32_0 = arith.constant 0 : i32
    return %c0_i32, %arg1 : i32, i32
  }
  func.func @transform_4(%arg0: i32, %arg1: i32) -> (i32, i32) {
    %c0_i32 = arith.constant 0 : i32
    %c0_i32_0 = arith.constant 0 : i32
    return %c0_i32, %arg1 : i32, i32
  }
  func.func @transform_5(%arg0: i32, %arg1: i32) -> (i32, i32) {
    %c0_i32 = arith.constant 0 : i32
    return %arg0, %arg1 : i32, i32
  }
}

</mosaic_0001>

<llo_original>
// kernel: tpu_custom_call.1
$region0: #{tpu_custom_call.1}
  #allocation0 [shape = 'u32[]', space=smem, size = 0x4, offset = 0x4, fixed_abs, tag = 'smem constant byte address 0x4 - core index']
  #allocation1 [shape = 'u32[144,128]{1,0:T(1,128)}', space=vmem, size = 0x12000, scoped, tag = 'internal scratch']
  %s0 = inlined_call_operand.hbm [shape: f32[8,128], index: 0, kind: input, shape index: {}]
  %s1 = inlined_call_operand.hbm [shape: f32[8,128], index: 1, kind: input, shape index: {}]
  %s2 = inlined_call_operand.hbm [shape: f32[128,128], index: 2, kind: input, shape index: {}]
  %s3 = inlined_call_operand.hbm [shape: f32[128,128], index: 3, kind: input, shape index: {}]
  %s4 = inlined_call_operand.vmem [shape: f32[1,128], index: 4, kind: input, shape index: {}]
  %s5 = inlined_call_operand.hbm [shape: f32[8,128], index: 5, kind: output, shape index: {}]
  %s6 = sld [smem:[#allocation0]]
  $region46: #{tpu_custom_call.1} parent=0
    _
  %s8 = ssub.s32 1, %s6
  %s9 = scalar_select 0, %s8, %s6
  $region1: #{tpu_custom_call.1} parent=0
    #allocation2 [shape = 'u8[4096]{0}', space=vmem, size = 0x1000, scoped, tag = 'input window, operand 0, single buffered']
    #allocation3 [shape = 's32[1]{0}', space=sflag, size = 0x4, scoped, tag = 'scoped memory for tpu_custom_call.1']
    #allocation4 [shape = 's32[1]{0}', space=sflag, size = 0x4, scoped, tag = 'scoped memory for tpu_custom_call.1']
    #allocation5 [shape = 'u8[4096]{0}', space=vmem, size = 0x1000, scoped, tag = 'input window, operand 1, single buffered']
    #allocation6 [shape = 's32[1]{0}', space=sflag, size = 0x4, scoped, tag = 'scoped memory for tpu_custom_call.1']
    #allocation7 [shape = 'u8[65536]{0}', space=vmem, size = 0x10000, scoped, tag = 'input window, operand 2, single buffered']
    #allocation8 [shape = 'u8[65536]{0}', space=vmem, size = 0x10000, scoped, tag = 'input window, operand 3, single buffered']
    #allocation9 [shape = 's32[1]{0}', space=sflag, size = 0x4, scoped, tag = 'scoped memory for tpu_custom_call.1']
    #allocation10 [shape = 'u8[4096]{0}', space=vmem, size = 0x1000, scoped, tag = 'output window, operand 0, single buffered']
    %10 = vsyncpa [#allocation3], 0
    %11 = vsyncpa [#allocation6], 0
    %12 = vsyncpa [#allocation9], 0
    %13 = vsyncpa [#allocation4], 0
    // Predicated region
    $region2: #{tpu_custom_call.1} parent=1 // pred_check
      _
    $region3: #{tpu_custom_call.1} parent=1 // pred_check_branch
      %15 = sbr.rel (0) target = $region5
    $region4: #{tpu_custom_call.1} parent=1 // pred_region
      %s17 = ssub.s32 128, 128
      %18 = vsyncadd [#allocation3], %s17
      %s20 = sshll.u32 [#allocation2], 4
      %s21 = int_to_ptr.vmem [resolvable:$true] %s20
      %23 = dma.hbm_to_vmem [thread:$0]  %s0, 128, %s21, [#allocation3]
    $region5: #{tpu_custom_call.1} parent=1 // pred_fallthru
      _
    // Predicated region
    $region6: #{tpu_custom_call.1} parent=1 // pred_check
      _
    $region7: #{tpu_custom_call.1} parent=1 // pred_check_branch
      %25 = sbr.rel (0) target = $region9
    $region8: #{tpu_custom_call.1} parent=1 // pred_region
      %s27 = ssub.s32 128, 128
      %28 = vsyncadd [#allocation6], %s27
      %s30 = sshll.u32 [#allocation5], 4
      %s31 = int_to_ptr.vmem [resolvable:$true] %s30
      %33 = dma.hbm_to_vmem [thread:$0]  %s1, 128, %s31, [#allocation6]
    $region9: #{tpu_custom_call.1} parent=1 // pred_fallthru
      _
    // Predicated region
    $region10: #{tpu_custom_call.1} parent=1 // pred_check
      _
    $region11: #{tpu_custom_call.1} parent=1 // pred_check_branch
      %35 = sbr.rel (0) target = $region13
    $region12: #{tpu_custom_call.1} parent=1 // pred_region
      %s37 = ssub.s32 2048, 2048
      %38 = vsyncadd [#allocation6], %s37
      %s39 = sshll.u32 [#allocation7], 4
      %s40 = int_to_ptr.vmem [resolvable:$true] %s39
      %45 = dma.hbm_to_vmem [thread:$0]  %s2, 2048, %s40, [#allocation6], 128, 128, 8
    $region13: #{tpu_custom_call.1} parent=1 // pred_fallthru
      _
    // Predicated region
    $region14: #{tpu_custom_call.1} parent=1 // pred_check
      _
    $region15: #{tpu_custom_call.1} parent=1 // pred_check_branch
      %47 = sbr.rel (0) target = $region17
    $region16: #{tpu_custom_call.1} parent=1 // pred_region
      %s49 = ssub.s32 2048, 2048
      %50 = vsyncadd [#allocation9], %s49
      %s51 = sshll.u32 [#allocation8], 4
      %s52 = int_to_ptr.vmem [resolvable:$true] %s51
      %57 = dma.hbm_to_vmem [thread:$0]  %s3, 2048, %s52, [#allocation9], 128, 128, 8
    $region17: #{tpu_custom_call.1} parent=1 // pred_fallthru
      _
    // Predicated region
    $region18: #{tpu_custom_call.1} parent=1 // pred_check
      _
    $region19: #{tpu_custom_call.1} parent=1 // pred_check_branch
      %59 = sbr.rel (0) target = $region21
    $region20: #{tpu_custom_call.1} parent=1 // pred_region
      _
    $region21: #{tpu_custom_call.1} parent=1 // pred_fallthru
      _
    // Predicated region
    $region22: #{tpu_custom_call.1} parent=1 // pred_check
      _
    $region23: #{tpu_custom_call.1} parent=1 // pred_check_branch
      %61 = sbr.rel (0) target = $region25
    $region24: #{tpu_custom_call.1} parent=1 // pred_region
      %62 = dma.done [#allocation3], 128
    $region25: #{tpu_custom_call.1} parent=1 // pred_fallthru
      _
    // Predicated region
    $region26: #{tpu_custom_call.1} parent=1 // pred_check
      _
    $region27: #{tpu_custom_call.1} parent=1 // pred_check_branch
      %64 = sbr.rel (0) target = $region29
    $region28: #{tpu_custom_call.1} parent=1 // pred_region
      %65 = dma.done [#allocation6], 128
    $region29: #{tpu_custom_call.1} parent=1 // pred_fallthru
      _
    // Predicated region
    $region30: #{tpu_custom_call.1} parent=1 // pred_check
      _
    $region31: #{tpu_custom_call.1} parent=1 // pred_check_branch
      %67 = sbr.rel (0) target = $region33
    $region32: #{tpu_custom_call.1} parent=1 // pred_region
      %68 = dma.done [#allocation6], 2048
    $region33: #{tpu_custom_call.1} parent=1 // pred_fallthru
      _
    // Predicated region
    $region34: #{tpu_custom_call.1} parent=1 // pred_check
      _
    $region35: #{tpu_custom_call.1} parent=1 // pred_check_branch
      %70 = sbr.rel (0) target = $region37
    $region36: #{tpu_custom_call.1} parent=1 // pred_region
      %71 = dma.done [#allocation9], 2048
    $region37: #{tpu_custom_call.1} parent=1 // pred_fallthru
      _
    %v72 = vld [vmem:[#allocation2] sm:$0xff]
    %v73 = vld [vmem:[#allocation7] sm:$0xff]
    %v74 = vld [vmem:[#allocation7 + $0x8] sm:$0xff]
    %v75 = vld [vmem:[#allocation7 + $0x10] sm:$0xff]
    %v76 = vld [vmem:[#allocation7 + $0x18] sm:$0xff]
    %v77 = vld [vmem:[#allocation7 + $0x20] sm:$0xff]
    %v78 = vld [vmem:[#allocation7 + $0x28] sm:$0xff]
    %v79 = vld [vmem:[#allocation7 + $0x30] sm:$0xff]
    %v80 = vld [vmem:[#allocation7 + $0x38] sm:$0xff]
    %v81 = vld [vmem:[#allocation7 + $0x40] sm:$0xff]
    %v82 = vld [vmem:[#allocation7 + $0x48] sm:$0xff]
    %v83 = vld [vmem:[#allocation7 + $0x50] sm:$0xff]
    %v84 = vld [vmem:[#allocation7 + $0x58] sm:$0xff]
    %v85 = vld [vmem:[#allocation7 + $0x60] sm:$0xff]
    %v86 = vld [vmem:[#allocation7 + $0x68] sm:$0xff]
    %v87 = vld [vmem:[#allocation7 + $0x70] sm:$0xff]
    %v88 = vld [vmem:[#allocation7 + $0x78] sm:$0xff]
    %v89 = vld [vmem:[#allocation5] sm:$0xff]
    %v90 = vld [vmem:[#allocation8] sm:$0xff]
    %v91 = vld [vmem:[#allocation8 + $0x8] sm:$0xff]
    %v92 = vld [vmem:[#allocation8 + $0x10] sm:$0xff]
    %v93 = vld [vmem:[#allocation8 + $0x18] sm:$0xff]
    %v94 = vld [vmem:[#allocation8 + $0x20] sm:$0xff]
    %v95 = vld [vmem:[#allocation8 + $0x28] sm:$0xff]
    %v96 = vld [vmem:[#allocation8 + $0x30] sm:$0xff]
    %v97 = vld [vmem:[#allocation8 + $0x38] sm:$0xff]
    %v98 = vld [vmem:[#allocation8 + $0x40] sm:$0xff]
    %v99 = vld [vmem:[#allocation8 + $0x48] sm:$0xff]
    %v100 = vld [vmem:[#allocation8 + $0x50] sm:$0xff]
    %v101 = vld [vmem:[#allocation8 + $0x58] sm:$0xff]
    %v102 = vld [vmem:[#allocation8 + $0x60] sm:$0xff]
    %v103 = vld [vmem:[#allocation8 + $0x68] sm:$0xff]
    %v104 = vld [vmem:[#allocation8 + $0x70] sm:$0xff]
    %v105 = vld [vmem:[#allocation8 + $0x78] sm:$0xff]
    %106 = vmatprep.subr.mxu0 0.0
    %107 = vmatpush1.msra.mxu0 %v105
    %108 = vmatprep.subr.mxu0 0.0
    %109 = vmatpush1.msra.mxu0 %v104
    %110 = vmatprep.subr.mxu0 0.0
    %111 = vmatpush1.msra.mxu0 %v103
    %112 = vmatprep.subr.mxu0 0.0
    %113 = vmatpush1.msra.mxu0 %v102
    %114 = vmatprep.subr.mxu0 0.0
    %115 = vmatpush1.msra.mxu0 %v101
    %116 = vmatprep.subr.mxu0 0.0
    %117 = vmatpush1.msra.mxu0 %v100
    %118 = vmatprep.subr.mxu0 0.0
    %119 = vmatpush1.msra.mxu0 %v99
    %120 = vmatprep.subr.mxu0 0.0
    %121 = vmatpush1.msra.mxu0 %v98
    %122 = vmatprep.subr.mxu0 0.0
    %123 = vmatpush1.msra.mxu0 %v97
    %124 = vmatprep.subr.mxu0 0.0
    %125 = vmatpush1.msra.mxu0 %v96
    %126 = vmatprep.subr.mxu0 0.0
    %127 = vmatpush1.msra.mxu0 %v95
    %128 = vmatprep.subr.mxu0 0.0
    %129 = vmatpush1.msra.mxu0 %v94
    %130 = vmatprep.subr.mxu0 0.0
    %131 = vmatpush1.msra.mxu0 %v93
    %132 = vmatprep.subr.mxu0 0.0
    %133 = vmatpush1.msra.mxu0 %v92
    %134 = vmatprep.subr.mxu0 0.0
    %135 = vmatpush1.msra.mxu0 %v91
    %136 = vmatprep.subr.mxu0 0.0
    %137 = vmatpush1.msra.mxu0 %v90
    %138 = vmatprep.subr.mxu0 0.0
    %139 = vmatpush2.msra.mxu0 0.0
    %140 = vmatprep.subr.mxu0 0.0
    %141 = vmatpush2.msra.mxu0 0.0
    %142 = vmatprep.subr.mxu0 0.0
    %143 = vmatpush2.msra.mxu0 0.0
    %144 = vmatprep.subr.mxu0 0.0
    %145 = vmatpush2.msra.mxu0 0.0
    %146 = vmatprep.subr.mxu0 0.0
    %147 = vmatpush2.msra.mxu0 0.0
    %148 = vmatprep.subr.mxu0 0.0
    %149 = vmatpush2.msra.mxu0 0.0
    %150 = vmatprep.subr.mxu0 0.0
    %151 = vmatpush2.msra.mxu0 0.0
    %152 = vmatprep.subr.mxu0 0.0
    %153 = vmatpush2.msra.mxu0 0.0
    %154 = vmatprep.subr.mxu0 0.0
    %155 = vmatpush2.msra.mxu0 0.0
    %156 = vmatprep.subr.mxu0 0.0
    %157 = vmatpush2.msra.mxu0 0.0
    %158 = vmatprep.subr.mxu0 0.0
    %159 = vmatpush2.msra.mxu0 0.0
    %160 = vmatprep.subr.mxu0 0.0
    %161 = vmatpush2.msra.mxu0 0.0
    %162 = vmatprep.subr.mxu0 0.0
    %163 = vmatpush2.msra.mxu0 0.0
    %164 = vmatprep.subr.mxu0 0.0
    %165 = vmatpush2.msra.mxu0 0.0
    %166 = vmatprep.subr.mxu0 0.0
    %167 = vmatpush2.msra.mxu0 0.0
    %168 = vmatprep.subr.mxu0 0.0
    %169 = vmatpush2.msra.mxu0 0.0
    %170 = vmatprep.mubr.f32.mxu0 0.0
    %171 = vmatmul.mubr.f32.gmra.mxu0 %v89
    %v172 = vpop.f32.mrf.mxu0
    %v173 = vadd.f32 0.0, %v172
    %v174 = vpop.f32.mrf.mxu0
    %175 = vdwg.mxu0
    %176 = vmatprep.subr.mxu0 0.0
    %177 = vmatpush1.msra.mxu0 %v88
    %178 = vmatprep.subr.mxu0 0.0
    %179 = vmatpush1.msra.mxu0 %v87
    %180 = vmatprep.subr.mxu0 0.0
    %181 = vmatpush1.msra.mxu0 %v86
    %182 = vmatprep.subr.mxu0 0.0
    %183 = vmatpush1.msra.mxu0 %v85
    %184 = vmatprep.subr.mxu0 0.0
    %185 = vmatpush1.msra.mxu0 %v84
    %186 = vmatprep.subr.mxu0 0.0
    %187 = vmatpush1.msra.mxu0 %v83
    %188 = vmatprep.subr.mxu0 0.0
    %189 = vmatpush1.msra.mxu0 %v82
    %190 = vmatprep.subr.mxu0 0.0
    %191 = vmatpush1.msra.mxu0 %v81
    %192 = vmatprep.subr.mxu0 0.0
    %193 = vmatpush1.msra.mxu0 %v80
    %194 = vmatprep.subr.mxu0 0.0
    %195 = vmatpush1.msra.mxu0 %v79
    %196 = vmatprep.subr.mxu0 0.0
    %197 = vmatpush1.msra.mxu0 %v78
    %198 = vmatprep.subr.mxu0 0.0
    %199 = vmatpush1.msra.mxu0 %v77
    %200 = vmatprep.subr.mxu0 0.0
    %201 = vmatpush1.msra.mxu0 %v76
    %202 = vmatprep.subr.mxu0 0.0
    %203 = vmatpush1.msra.mxu0 %v75
    %204 = vmatprep.subr.mxu0 0.0
    %205 = vmatpush1.msra.mxu0 %v74
    %206 = vmatprep.subr.mxu0 0.0
    %207 = vmatpush1.msra.mxu0 %v73
    %208 = vmatprep.subr.mxu0 0.0
    %209 = vmatpush2.msra.mxu0 0.0
    %210 = vmatprep.subr.mxu0 0.0
    %211 = vmatpush2.msra.mxu0 0.0
    %212 = vmatprep.subr.mxu0 0.0
    %213 = vmatpush2.msra.mxu0 0.0
    %214 = vmatprep.subr.mxu0 0.0
    %215 = vmatpush2.msra.mxu0 0.0
    %216 = vmatprep.subr.mxu0 0.0
    %217 = vmatpush2.msra.mxu0 0.0
    %218 = vmatprep.subr.mxu0 0.0
    %219 = vmatpush2.msra.mxu0 0.0
    %220 = vmatprep.subr.mxu0 0.0
    %221 = vmatpush2.msra.mxu0 0.0
    %222 = vmatprep.subr.mxu0 0.0
    %223 = vmatpush2.msra.mxu0 0.0
    %224 = vmatprep.subr.mxu0 0.0
    %225 = vmatpush2.msra.mxu0 0.0
    %226 = vmatprep.subr.mxu0 0.0
    %227 = vmatpush2.msra.mxu0 0.0
    %228 = vmatprep.subr.mxu0 0.0
    %229 = vmatpush2.msra.mxu0 0.0
    %230 = vmatprep.subr.mxu0 0.0
    %231 = vmatpush2.msra.mxu0 0.0
    %232 = vmatprep.subr.mxu0 0.0
    %233 = vmatpush2.msra.mxu0 0.0
    %234 = vmatprep.subr.mxu0 0.0
    %235 = vmatpush2.msra.mxu0 0.0
    %236 = vmatprep.subr.mxu0 0.0
    %237 = vmatpush2.msra.mxu0 0.0
    %238 = vmatprep.subr.mxu0 0.0
    %239 = vmatpush2.msra.mxu0 0.0
    %240 = vmatprep.mubr.f32.mxu0 0.0
    %241 = vmatmul.mubr.f32.gmra.mxu0 %v72
    %v242 = vpop.f32.mrf.mxu0
    %v243 = vadd.f32 %v173, %v242
    %v244 = vpop.f32.mrf.mxu0
    %245 = vdwg.mxu0
    %v246 = vld [vmem:[%s4] sm:$0x1]
    %v248 = vlaneseq
    %v249 = vshrl.u32 %v248, 7
    %v250 = vsub.s32 0, %v249
    %v251 = vrot.slane %v246, %v250
    %v253 = vadd.f32 %v243, %v251
    %v254 = vtanh.pop %v253
    %v255 = vsub.f32 %v254, %v89
    %v256 = vmul.f32 %v255, 0.5
    %v257 = vadd.f32 %v89, %v256
    %258 = vst [vmem:[#allocation10] sm:$0xff] %v257
    // Predicated region
    $region38: #{tpu_custom_call.1} parent=1 // pred_check
      _
    $region39: #{tpu_custom_call.1} parent=1 // pred_check_branch
      %260 = sbr.rel (0) target = $region41
    $region40: #{tpu_custom_call.1} parent=1 // pred_region
      %s262 = ssub.s32 128, 128
      %263 = vsyncadd [#allocation4], %s262
      %s265 = sshll.u32 [#allocation10], 4
      %s266 = int_to_ptr.vmem [resolvable:$true] %s265
      %268 = dma.vmem_to_hbm [thread:$0]  %s266, 128, %s5, [#allocation4]
    $region41: #{tpu_custom_call.1} parent=1 // pred_fallthru
      _
    // Predicated region
    $region42: #{tpu_custom_call.1} parent=1 // pred_check
      _
    $region43: #{tpu_custom_call.1} parent=1 // pred_check_branch
      %270 = sbr.rel (0) target = $region45
    $region44: #{tpu_custom_call.1} parent=1 // pred_region
      %271 = dma.done [#allocation4], 128
    $region45: #{tpu_custom_call.1} parent=1 // pred_fallthru
      _
    %272 = vsyncpa [#allocation3], 1
    %273 = vsyncpa [#allocation6], 1
    %274 = vsyncpa [#allocation9], 1
    %275 = vsyncpa [#allocation4], 1

</llo_original>
